<compile_context>
chip_gen: v7x
topology: tpu7x:2x2x1
jax: 0.10.0
libtpu: 0.0.40
codegen_flags: <defaults>
</compile_context>

<pallas_src>
import functools

import jax
import jax.numpy as jnp
from jax.experimental import pallas as pl
from jax.experimental.pallas import tpu as pltpu


def _round_up(x, m):
    return ((x + m - 1) // m) * m


def _cdiv(a, b):
    return -(-a // b)


# ---------------------------------------------------------------------------
# Kernel: one batch tile -> (policy [TB, A], value [TB, 1])
# ---------------------------------------------------------------------------
def fused_actor_critic_kernel(x_ref, w1_ref, b1_ref, w2_ref, b2_ref,
                              w3_ref, b3_ref, policy_ref, value_ref, *,
                              action_dim):
    # bf16 MXU inputs, f32 accumulation.  Weights are already bf16 in VMEM;
    # activations are cast right before each dot.
    x = x_ref[...].astype(jnp.bfloat16)
    h = jnp.dot(x, w1_ref[...], preferred_element_type=jnp.float32) + b1_ref[...]
    h = jnp.maximum(h, 0.0)
    h = jnp.dot(h.astype(jnp.bfloat16), w2_ref[...],
                preferred_element_type=jnp.float32) + b2_ref[...]
    h = jnp.maximum(h, 0.0)
    y = jnp.dot(h.astype(jnp.bfloat16), w3_ref[...],
                preferred_element_type=jnp.float32) + b3_ref[...]

    # Fused output lanes: [actor logits | critic value | zero padding].
    logits = y[:, :action_dim]
    m = jnp.max(logits, axis=-1, keepdims=True)
    e = jnp.exp(logits - m)
    denom = jnp.sum(e, axis=-1, keepdims=True)
    policy_ref[...] = (e / denom).astype(policy_ref.dtype)      # exact divide
    value_ref[...] = y[:, action_dim:action_dim + 1].astype(value_ref.dtype)


# ---------------------------------------------------------------------------
# Parameter packing: per-layer actor/critic weights -> fused bf16 blocks
# ---------------------------------------------------------------------------
def pack_fused_params(p, obs_dim, action_dim, hidden=64):
    H = 2 * hidden
    HP = _round_up(H, 128)                   # fused hidden width (=128)
    OUTW = _round_up(action_dim + 1, 128)    # fused output width (=128)

    w1 = jnp.zeros((obs_dim, HP), jnp.float32)
    w1 = w1.at[:, :hidden].set(p["wa1"]).at[:, hidden:H].set(p["wc1"])
    b1 = jnp.zeros((1, HP), jnp.float32)
    b1 = b1.at[:, :hidden].set(p["ba1"]).at[:, hidden:H].set(p["bc1"])

    w2 = jnp.zeros((HP, HP), jnp.float32)
    w2 = w2.at[:hidden, :hidden].set(p["wa2"]).at[hidden:H, hidden:H].set(p["wc2"])
    b2 = jnp.zeros((1, HP), jnp.float32)
    b2 = b2.at[:, :hidden].set(p["ba2"]).at[:, hidden:H].set(p["bc2"])

    w3 = jnp.zeros((HP, OUTW), jnp.float32)
    w3 = w3.at[:hidden, :action_dim].set(p["wa3"])
    w3 = w3.at[hidden:H, action_dim:action_dim + 1].set(p["wc3"])
    b3 = jnp.zeros((1, OUTW), jnp.float32)
    b3 = b3.at[:, :action_dim].set(p["ba3"])
    b3 = b3.at[:, action_dim:action_dim + 1].set(p["bc3"])

    # bf16 MXU inputs (block-diagonal zeros stay exactly zero); biases stay f32.
    return dict(w1=w1.astype(jnp.bfloat16), b1=b1,
                w2=w2.astype(jnp.bfloat16), b2=b2,
                w3=w3.astype(jnp.bfloat16), b3=b3)


# ---------------------------------------------------------------------------
# Wrapper: balanced batch-tiled grid, VMEM-resident weights, two dense outputs
# ---------------------------------------------------------------------------
def actor_critic_forward(x, fused, action_dim, *, batch_tile=1024):
    B, obs_dim = x.shape
    HP = fused["w1"].shape[1]
    OUTW = fused["w3"].shape[1]

    # Balanced batch tiling (pad waste < 8 rows); force >= 2 tiles when B > 8
    # so the "parallel" batch axis shards across both v7x TensorCores.
    n_tiles = max(_cdiv(B, batch_tile), 1)
    if B > 8 and n_tiles < 2:
        n_tiles = 2
    TB = _round_up(_cdiv(B, n_tiles), 8)
    if TB > 256:
        TB = _round_up(TB, 256)              # keep MXU row passes full at large TB
    n_tiles = _cdiv(B, TB)
    B_pad = n_tiles * TB
    if B_pad != B:
        x = jnp.pad(x, ((0, B_pad - B), (0, 0)))

    args = (x, fused["w1"], fused["b1"], fused["w2"], fused["b2"],
            fused["w3"], fused["b3"])

    # Weights/biases: constant index map -> block stays VMEM-resident.
    resident = lambda shape: pl.BlockSpec(shape, lambda i: (0, 0))
    in_specs = [
        pl.BlockSpec((TB, obs_dim), lambda i: (i, 0)),   # x pipelines per tile
        resident((obs_dim, HP)), resident((1, HP)),
        resident((HP, HP)), resident((1, HP)),
        resident((HP, OUTW)), resident((1, OUTW)),
    ]
    out_specs = (
        pl.BlockSpec((TB, action_dim), lambda i: (i, 0)),
        pl.BlockSpec((TB, 1), lambda i: (i, 0)),
    )
    out_shape = (jax.ShapeDtypeStruct((B_pad, action_dim), jnp.float32),
                 jax.ShapeDtypeStruct((B_pad, 1), jnp.float32))

    flops = 2 * B_pad * (obs_dim * HP + HP * HP + HP * OUTW)
    bytes_accessed = (int(x.size) * 4
                      + sum(int(v.size) * int(v.dtype.itemsize)
                            for v in fused.values())
                      + B_pad * (action_dim + 1) * 4)
    cost = pl.CostEstimate(flops=int(flops),
                           transcendentals=int(B_pad * action_dim),
                           bytes_accessed=int(bytes_accessed))

    policy, value = pl.pallas_call(
        functools.partial(fused_actor_critic_kernel, action_dim=action_dim),
        out_shape=out_shape,
        grid=(n_tiles,),
        in_specs=in_specs,
        out_specs=out_specs,
        compiler_params=pltpu.CompilerParams(
            dimension_semantics=("parallel",)),
        cost_estimate=cost,
    )(*args)

    if B_pad != B:          # drop garbage tail-tile rows (tiny; waste < 1 tile)
        policy = policy[:B]
        value = value[:B]
    return policy, value


# ---------------------------------------------------------------------------
# PyTorch-style init (weights already transposed to [in, out], bias [1, out])
# ---------------------------------------------------------------------------
def init_linear(key, in_dim, out_dim):
    kw, kb = jax.random.split(key)
    bound = 1.0 / jnp.sqrt(float(in_dim))
    w = jax.random.uniform(kw, (in_dim, out_dim), jnp.float32, -bound, bound)
    b = jax.random.uniform(kb, (1, out_dim), jnp.float32, -bound, bound)
    return w, b


def init_actor_critic_params(key, obs_dim, action_dim, hidden_dims=(64, 64)):
    keys = jax.random.split(key, 6)
    h1, h2 = hidden_dims
    wa1, ba1 = init_linear(keys[0], obs_dim, h1)
    wa2, ba2 = init_linear(keys[1], h1, h2)
    wa3, ba3 = init_linear(keys[2], h2, action_dim)
    wc1, bc1 = init_linear(keys[3], obs_dim, h1)
    wc2, bc2 = init_linear(keys[4], h1, h2)
    wc3, bc3 = init_linear(keys[5], h2, 1)
    return dict(wa1=wa1, ba1=ba1, wa2=wa2, ba2=ba2, wa3=wa3, ba3=ba3,
                wc1=wc1, bc1=bc1, wc2=wc2, bc2=bc2, wc3=wc3, bc3=bc3)


def reference_forward(x, p):
    """Pure-JAX f32 reference (unfused) for correctness checking."""
    h = jnp.maximum(x @ p["wa1"] + p["ba1"], 0.0)
    h = jnp.maximum(h @ p["wa2"] + p["ba2"], 0.0)
    logits = h @ p["wa3"] + p["ba3"]
    policy = jax.nn.softmax(logits, axis=-1)
    hc = jnp.maximum(x @ p["wc1"] + p["bc1"], 0.0)
    hc = jnp.maximum(hc @ p["wc2"] + p["bc2"], 0.0)
    value = hc @ p["wc3"] + p["bc3"]
    return policy, value


# TODO(synk): get_action / evaluate_actions (masking, multinomial sampling,
# gather, log-prob/entropy) are host-side control flow in the original module
# and are intentionally left outside the kernel.

if __name__ == "__main__":
    B, OBS_DIM, ACTION_DIM = 8, 32, 16
    key = jax.random.PRNGKey(0)
    k_params, k_x = jax.random.split(key)

    params = init_actor_critic_params(k_params, OBS_DIM, ACTION_DIM, (64, 64))
    fused = pack_fused_params(params, OBS_DIM, ACTION_DIM, hidden=64)
    x = jax.random.normal(k_x, (B, OBS_DIM), jnp.float32)

    policy, value = actor_critic_forward(x, fused, ACTION_DIM)
    policy = jax.block_until_ready(policy)
    value = jax.block_until_ready(value)

    # Sanity-check against pure-JAX f32 reference.
    ref_policy, ref_value = reference_forward(x, params)
    assert policy.shape == (B, ACTION_DIM) and value.shape == (B, 1)
    # bf16 MXU inputs (f32 accumulate) -> small quantization noise vs f32 ref.
    assert jnp.allclose(value, ref_value, atol=5e-2, rtol=1e-2)
    assert jnp.allclose(policy, ref_policy, atol=1e-2, rtol=1e-2)
    # Exact softmax normalization (exact divide, not approx reciprocal).
    assert jnp.allclose(jnp.sum(policy, axis=-1), 1.0, atol=1e-4)

    print("KERNEL_OK")
</pallas_src>

<mosaic_0001>
module attributes {stable_mosaic.version = 11 : i64} {
  func.func @fused_actor_critic_kernel(%arg0: i32, %arg1: memref<8x32xf32, #tpu.memory_space<vmem>>, %arg2: memref<32x128xbf16, #tpu.memory_space<vmem>>, %arg3: memref<1x128xf32, #tpu.memory_space<vmem>>, %arg4: memref<128x128xbf16, #tpu.memory_space<vmem>>, %arg5: memref<1x128xf32, #tpu.memory_space<vmem>>, %arg6: memref<128x128xbf16, #tpu.memory_space<vmem>>, %arg7: memref<1x128xf32, #tpu.memory_space<vmem>>, %arg8: memref<8x16xf32, #tpu.memory_space<vmem>>, %arg9: memref<8x1xf32, #tpu.memory_space<vmem>>) attributes {dimension_semantics = [#tpu.dimension_semantics<parallel>], iteration_bounds = array<i64: 1>, scalar_prefetch = 0 : i64, scratch_operands = 0 : i64, tpu.core_type = #tpu.core_type<tc>, window_params = [{transform_indices = @transform_0, window_bounds = array<i64: 8, 32>}, {pipeline_mode = #tpu.pipeline_mode<synchronous>, transform_indices = @transform_1, window_bounds = array<i64: 32, 128>}, {pipeline_mode = #tpu.pipeline_mode<synchronous>, transform_indices = @transform_2, window_bounds = array<i64: 1, 128>}, {pipeline_mode = #tpu.pipeline_mode<synchronous>, transform_indices = @transform_3, window_bounds = array<i64: 128, 128>}, {pipeline_mode = #tpu.pipeline_mode<synchronous>, transform_indices = @transform_4, window_bounds = array<i64: 1, 128>}, {pipeline_mode = #tpu.pipeline_mode<synchronous>, transform_indices = @transform_5, window_bounds = array<i64: 128, 128>}, {pipeline_mode = #tpu.pipeline_mode<synchronous>, transform_indices = @transform_6, window_bounds = array<i64: 1, 128>}, {transform_indices = @transform_7, window_bounds = array<i64: 8, 16>}, {transform_indices = @transform_8, window_bounds = array<i64: 8, 1>}]} {
    %c0 = arith.constant 0 : index
    %c0_0 = arith.constant 0 : index
    %0 = vector.load %arg1[%c0, %c0_0] : memref<8x32xf32, #tpu.memory_space<vmem>>, vector<8x32xf32>
    %1 = arith.truncf %0 : vector<8x32xf32> to vector<8x32xbf16>
    %c0_1 = arith.constant 0 : index
    %c0_2 = arith.constant 0 : index
    %2 = vector.load %arg2[%c0_1, %c0_2] : memref<32x128xbf16, #tpu.memory_space<vmem>>, vector<32x128xbf16>
    %cst = arith.constant dense<0.000000e+00> : vector<8x128xf32>
    %3 = tpu.matmul %1, %2, %cst {dimension_numbers = #tpu.dot_dimension_numbers<[1], [0], [0], [1], [0, 0, 1, 1], [], []>} : vector<8x32xbf16>, vector<32x128xbf16>, vector<8x128xf32> -> vector<8x128xf32>
    %c0_3 = arith.constant 0 : index
    %c0_4 = arith.constant 0 : index
    %4 = vector.load %arg3[%c0_3, %c0_4] : memref<1x128xf32, #tpu.memory_space<vmem>>, vector<1x128xf32>
    %5 = vector.broadcast %4 : vector<1x128xf32> to vector<8x128xf32>
    %6 = arith.addf %3, %5 : vector<8x128xf32>
    %cst_5 = arith.constant 0.000000e+00 : f32
    %7 = vector.broadcast %cst_5 : f32 to vector<8x128xf32>
    %8 = arith.maximumf %6, %7 : vector<8x128xf32>
    %9 = arith.truncf %8 : vector<8x128xf32> to vector<8x128xbf16>
    %c0_6 = arith.constant 0 : index
    %c0_7 = arith.constant 0 : index
    %10 = vector.load %arg4[%c0_6, %c0_7] : memref<128x128xbf16, #tpu.memory_space<vmem>>, vector<128x128xbf16>
    %cst_8 = arith.constant dense<0.000000e+00> : vector<8x128xf32>
    %11 = tpu.matmul %9, %10, %cst_8 {dimension_numbers = #tpu.dot_dimension_numbers<[1], [0], [0], [1], [0, 0, 1, 1], [], []>} : vector<8x128xbf16>, vector<128x128xbf16>, vector<8x128xf32> -> vector<8x128xf32>
    %c0_9 = arith.constant 0 : index
    %c0_10 = arith.constant 0 : index
    %12 = vector.load %arg5[%c0_9, %c0_10] : memref<1x128xf32, #tpu.memory_space<vmem>>, vector<1x128xf32>
    %13 = vector.broadcast %12 : vector<1x128xf32> to vector<8x128xf32>
    %14 = arith.addf %11, %13 : vector<8x128xf32>
    %cst_11 = arith.constant 0.000000e+00 : f32
    %15 = vector.broadcast %cst_11 : f32 to vector<8x128xf32>
    %16 = arith.maximumf %14, %15 : vector<8x128xf32>
    %17 = arith.truncf %16 : vector<8x128xf32> to vector<8x128xbf16>
    %c0_12 = arith.constant 0 : index
    %c0_13 = arith.constant 0 : index
    %18 = vector.load %arg6[%c0_12, %c0_13] : memref<128x128xbf16, #tpu.memory_space<vmem>>, vector<128x128xbf16>
    %cst_14 = arith.constant dense<0.000000e+00> : vector<8x128xf32>
    %19 = tpu.matmul %17, %18, %cst_14 {dimension_numbers = #tpu.dot_dimension_numbers<[1], [0], [0], [1], [0, 0, 1, 1], [], []>} : vector<8x128xbf16>, vector<128x128xbf16>, vector<8x128xf32> -> vector<8x128xf32>
    %c0_15 = arith.constant 0 : index
    %c0_16 = arith.constant 0 : index
    %20 = vector.load %arg7[%c0_15, %c0_16] : memref<1x128xf32, #tpu.memory_space<vmem>>, vector<1x128xf32>
    %21 = vector.broadcast %20 : vector<1x128xf32> to vector<8x128xf32>
    %22 = arith.addf %19, %21 : vector<8x128xf32>
    %23 = vector.extract_strided_slice %22 {offsets = [0, 0], sizes = [8, 16], strides = [1, 1]} : vector<8x128xf32> to vector<8x16xf32>
    %cst_17 = arith.constant dense<0xFF800000> : vector<8xf32>
    %24 = vector.multi_reduction <maximumf>, %23, %cst_17 [1] : vector<8x16xf32> to vector<8xf32>
    %25 = vector.shape_cast %24 : vector<8xf32> to vector<8x1xf32>
    %26 = vector.broadcast %25 : vector<8x1xf32> to vector<8x16xf32>
    %27 = arith.subf %23, %26 : vector<8x16xf32>
    %28 = math.exp %27 : vector<8x16xf32>
    %cst_18 = arith.constant dense<0.000000e+00> : vector<8xf32>
    %29 = vector.multi_reduction <add>, %28, %cst_18 [1] : vector<8x16xf32> to vector<8xf32>
    %30 = vector.shape_cast %29 : vector<8xf32> to vector<8x1xf32>
    %31 = vector.broadcast %30 : vector<8x1xf32> to vector<8x16xf32>
    %32 = arith.divf %28, %31 : vector<8x16xf32>
    %c0_19 = arith.constant 0 : index
    %c0_20 = arith.constant 0 : index
    %33 = vector.load %arg8[%c0_19, %c0_20] : memref<8x16xf32, #tpu.memory_space<vmem>>, vector<8x16xf32>
    tpu.vector_store %arg8[%c0_19, %c0_20], %32 {strides = array<i32>} : memref<8x16xf32, #tpu.memory_space<vmem>>, vector<8x16xf32>,
    %34 = vector.extract_strided_slice %22 {offsets = [0, 16], sizes = [8, 1], strides = [1, 1]} : vector<8x128xf32> to vector<8x1xf32>
    %c0_21 = arith.constant 0 : index
    %c0_22 = arith.constant 0 : index
    %35 = vector.load %arg9[%c0_21, %c0_22] : memref<8x1xf32, #tpu.memory_space<vmem>>, vector<8x1xf32>
    tpu.vector_store %arg9[%c0_21, %c0_22], %34 {strides = array<i32>} : memref<8x1xf32, #tpu.memory_space<vmem>>, vector<8x1xf32>,
    return
  }
  func.func @transform_0(%arg0: i32) -> (i32, i32) {
    %c0_i32 = arith.constant 0 : i32
    %c0_i32_0 = arith.constant 0 : i32
    return %arg0, %c0_i32 : i32, i32
  }
  func.func @transform_1(%arg0: i32) -> (i32, i32) {
    %c0_i32 = arith.constant 0 : i32
    %c0_i32_0 = arith.constant 0 : i32
    %c0_i32_1 = arith.constant 0 : i32
    return %c0_i32, %c0_i32_0 : i32, i32
  }
  func.func @transform_2(%arg0: i32) -> (i32, i32) {
    %c0_i32 = arith.constant 0 : i32
    %c0_i32_0 = arith.constant 0 : i32
    %c0_i32_1 = arith.constant 0 : i32
    return %c0_i32, %c0_i32_0 : i32, i32
  }
  func.func @transform_3(%arg0: i32) -> (i32, i32) {
    %c0_i32 = arith.constant 0 : i32
    %c0_i32_0 = arith.constant 0 : i32
    %c0_i32_1 = arith.constant 0 : i32
    return %c0_i32, %c0_i32_0 : i32, i32
  }
  func.func @transform_4(%arg0: i32) -> (i32, i32) {
    %c0_i32 = arith.constant 0 : i32
    %c0_i32_0 = arith.constant 0 : i32
    %c0_i32_1 = arith.constant 0 : i32
    return %c0_i32, %c0_i32_0 : i32, i32
  }
  func.func @transform_5(%arg0: i32) -> (i32, i32) {
    %c0_i32 = arith.constant 0 : i32
    %c0_i32_0 = arith.constant 0 : i32
    %c0_i32_1 = arith.constant 0 : i32
    return %c0_i32, %c0_i32_0 : i32, i32
  }
  func.func @transform_6(%arg0: i32) -> (i32, i32) {
    %c0_i32 = arith.constant 0 : i32
    %c0_i32_0 = arith.constant 0 : i32
    %c0_i32_1 = arith.constant 0 : i32
    return %c0_i32, %c0_i32_0 : i32, i32
  }
  func.func @transform_7(%arg0: i32) -> (i32, i32) {
    %c0_i32 = arith.constant 0 : i32
    %c0_i32_0 = arith.constant 0 : i32
    return %arg0, %c0_i32 : i32, i32
  }
  func.func @transform_8(%arg0: i32) -> (i32, i32) {
    %c0_i32 = arith.constant 0 : i32
    %c0_i32_0 = arith.constant 0 : i32
    return %arg0, %c0_i32 : i32, i32
  }
}

</mosaic_0001>

<llo_original>
// kernel: tpu_custom_call.1
$region0: #{tpu_custom_call.1}
  #allocation0 [shape = 'u32[]', space=smem, size = 0x4, offset = 0x4, fixed_abs, tag = 'smem constant byte address 0x4 - core index']
  #allocation1 [shape = 'u32[144,128]{1,0:T(1,128)}', space=vmem, size = 0x12000, scoped, tag = 'internal scratch']
  %s0 = inlined_call_operand.hbm [shape: f32[8,32], index: 0, kind: input, shape index: {}]
  %s1 = inlined_call_operand.hbm [shape: bf16[32,128], index: 1, kind: input, shape index: {}]
  %s2 = inlined_call_operand.vmem [shape: f32[1,128], index: 2, kind: input, shape index: {}]
  %s3 = inlined_call_operand.hbm [shape: bf16[128,128], index: 3, kind: input, shape index: {}]
  %s4 = inlined_call_operand.vmem [shape: f32[1,128], index: 4, kind: input, shape index: {}]
  %s5 = inlined_call_operand.hbm [shape: bf16[128,128], index: 5, kind: input, shape index: {}]
  %s6 = inlined_call_operand.vmem [shape: f32[1,128], index: 6, kind: input, shape index: {}]
  %s7 = inlined_call_operand.hbm [shape: f32[8,16], index: 7, kind: output, shape index: {0}]
  %s8 = inlined_call_operand.vmem [shape: f32[8,1], index: 8, kind: output, shape index: {1}]
  %9 = xla_tuple %s7, %s8
  %s10 = sld [smem:[#allocation0]]
  $region62: #{tpu_custom_call.1} parent=0
    _
  %s12 = ssub.s32 1, %s10
  %s13 = scalar_select 0, %s12, %s10
  $region1: #{tpu_custom_call.1} parent=0
    #allocation2 [shape = 'u8[4096]{0}', space=vmem, size = 0x1000, scoped, tag = 'input window, operand 0, single buffered']
    #allocation3 [shape = 's32[1]{0}', space=sflag, size = 0x4, scoped, tag = 'scoped memory for tpu_custom_call.1']
    #allocation4 [shape = 's32[1]{0}', space=sflag, size = 0x4, scoped, tag = 'scoped memory for tpu_custom_call.1']
    #allocation5 [shape = 'u8[8192]{0}', space=vmem, size = 0x2000, scoped, tag = 'input window, operand 1, single buffered']
    #allocation6 [shape = 's32[1]{0}', space=sflag, size = 0x4, scoped, tag = 'scoped memory for tpu_custom_call.1']
    #allocation7 [shape = 'u8[32768]{0}', space=vmem, size = 0x8000, scoped, tag = 'input window, operand 3, single buffered']
    #allocation8 [shape = 'u8[32768]{0}', space=vmem, size = 0x8000, scoped, tag = 'input window, operand 5, single buffered']
    #allocation9 [shape = 's32[1]{0}', space=sflag, size = 0x4, scoped, tag = 'scoped memory for tpu_custom_call.1']
    #allocation10 [shape = 'u8[4096]{0}', space=vmem, size = 0x1000, scoped, tag = 'output window, operand 0, single buffered']
    %14 = vsyncpa [#allocation3], 0
    %15 = vsyncpa [#allocation6], 0
    %16 = vsyncpa [#allocation9], 0
    %17 = vsyncpa [#allocation4], 0
    // Predicated region
    $region2: #{tpu_custom_call.1} parent=1 // pred_check
      _
    $region3: #{tpu_custom_call.1} parent=1 // pred_check_branch
      %19 = sbr.rel (0) target = $region5
    $region4: #{tpu_custom_call.1} parent=1 // pred_region
      %s21 = ssub.s32 128, 128
      %22 = vsyncadd [#allocation3], %s21
      %s24 = sshll.u32 [#allocation2], 4
      %s25 = int_to_ptr.vmem [resolvable:$true] %s24
      %27 = dma.hbm_to_vmem [thread:$0]  %s0, 128, %s25, [#allocation3]
    $region5: #{tpu_custom_call.1} parent=1 // pred_fallthru
      _
    // Predicated region
    $region6: #{tpu_custom_call.1} parent=1 // pred_check
      _
    $region7: #{tpu_custom_call.1} parent=1 // pred_check_branch
      %29 = sbr.rel (0) target = $region9
    $region8: #{tpu_custom_call.1} parent=1 // pred_region
      %s31 = ssub.s32 256, 256
      %32 = vsyncadd [#allocation6], %s31
      %s33 = sshll.u32 [#allocation5], 4
      %s34 = int_to_ptr.vmem [resolvable:$true] %s33
      %39 = dma.hbm_to_vmem [thread:$0]  %s1, 256, %s34, [#allocation6], 64, 64, 4
    $region9: #{tpu_custom_call.1} parent=1 // pred_fallthru
      _
    // Predicated region
    $region10: #{tpu_custom_call.1} parent=1 // pred_check
      _
    $region11: #{tpu_custom_call.1} parent=1 // pred_check_branch
      %41 = sbr.rel (0) target = $region13
    $region12: #{tpu_custom_call.1} parent=1 // pred_region
      _
    $region13: #{tpu_custom_call.1} parent=1 // pred_fallthru
      _
    // Predicated region
    $region14: #{tpu_custom_call.1} parent=1 // pred_check
      _
    $region15: #{tpu_custom_call.1} parent=1 // pred_check_branch
      %43 = sbr.rel (0) target = $region17
    $region16: #{tpu_custom_call.1} parent=1 // pred_region
      %s45 = ssub.s32 1024, 1024
      %46 = vsyncadd [#allocation6], %s45
      %s47 = sshll.u32 [#allocation7], 4
      %s48 = int_to_ptr.vmem [resolvable:$true] %s47
      %53 = dma.hbm_to_vmem [thread:$0]  %s3, 1024, %s48, [#allocation6], 64, 64, 4
    $region17: #{tpu_custom_call.1} parent=1 // pred_fallthru
      _
    // Predicated region
    $region18: #{tpu_custom_call.1} parent=1 // pred_check
      _
    $region19: #{tpu_custom_call.1} parent=1 // pred_check_branch
      %55 = sbr.rel (0) target = $region21
    $region20: #{tpu_custom_call.1} parent=1 // pred_region
      _
    $region21: #{tpu_custom_call.1} parent=1 // pred_fallthru
      _
    // Predicated region
    $region22: #{tpu_custom_call.1} parent=1 // pred_check
      _
    $region23: #{tpu_custom_call.1} parent=1 // pred_check_branch
      %57 = sbr.rel (0) target = $region25
    $region24: #{tpu_custom_call.1} parent=1 // pred_region
      %s59 = ssub.s32 1024, 1024
      %60 = vsyncadd [#allocation9], %s59
      %s61 = sshll.u32 [#allocation8], 4
      %s62 = int_to_ptr.vmem [resolvable:$true] %s61
      %67 = dma.hbm_to_vmem [thread:$0]  %s5, 1024, %s62, [#allocation9], 64, 64, 4
    $region25: #{tpu_custom_call.1} parent=1 // pred_fallthru
      _
    // Predicated region
    $region26: #{tpu_custom_call.1} parent=1 // pred_check
      _
    $region27: #{tpu_custom_call.1} parent=1 // pred_check_branch
      %69 = sbr.rel (0) target = $region29
    $region28: #{tpu_custom_call.1} parent=1 // pred_region
      _
    $region29: #{tpu_custom_call.1} parent=1 // pred_fallthru
      _
    // Predicated region
    $region30: #{tpu_custom_call.1} parent=1 // pred_check
      _
    $region31: #{tpu_custom_call.1} parent=1 // pred_check_branch
      %71 = sbr.rel (0) target = $region33
    $region32: #{tpu_custom_call.1} parent=1 // pred_region
      %72 = dma.done [#allocation3], 128
    $region33: #{tpu_custom_call.1} parent=1 // pred_fallthru
      _
    // Predicated region
    $region34: #{tpu_custom_call.1} parent=1 // pred_check
      _
    $region35: #{tpu_custom_call.1} parent=1 // pred_check_branch
      %74 = sbr.rel (0) target = $region37
    $region36: #{tpu_custom_call.1} parent=1 // pred_region
      %75 = dma.done [#allocation6], 256
    $region37: #{tpu_custom_call.1} parent=1 // pred_fallthru
      _
    // Predicated region
    $region38: #{tpu_custom_call.1} parent=1 // pred_check
      _
    $region39: #{tpu_custom_call.1} parent=1 // pred_check_branch
      %77 = sbr.rel (0) target = $region41
    $region40: #{tpu_custom_call.1} parent=1 // pred_region
      %78 = dma.done [#allocation6], 1024
    $region41: #{tpu_custom_call.1} parent=1 // pred_fallthru
      _
    // Predicated region
    $region42: #{tpu_custom_call.1} parent=1 // pred_check
      _
    $region43: #{tpu_custom_call.1} parent=1 // pred_check_branch
      %80 = sbr.rel (0) target = $region45
    $region44: #{tpu_custom_call.1} parent=1 // pred_region
      %81 = dma.done [#allocation9], 1024
    $region45: #{tpu_custom_call.1} parent=1 // pred_fallthru
      _
    %v83 = vld [vmem:[#allocation2] sm:$0xff]
    %v84 = vpack.c.bf16 %v83, %v83
    %v85 = vld [vmem:[#allocation5] sm:$0xf]
    %v86 = vld [vmem:[#allocation5 + $0x4] sm:$0xf]
    %v87 = vld [vmem:[#allocation5 + $0x8] sm:$0xf]
    %v88 = vld [vmem:[#allocation5 + $0xc] sm:$0xf]
    %v89 = vld [vmem:[%s2] sm:$0x1]
    %v91 = vlaneseq
    %v92 = vshrl.u32 %v91, 7
    %v93 = vsub.s32 0, %v92
    %v94 = vrot.slane %v89, %v93
    %v100 = vunpack.c.l.b16 %v85
    %v101 = vunpack.c.l.b16 %v86
    %v102 = vunpack.c.l.b16 %v87
    %v103 = vunpack.c.l.b16 %v88
    %v104 = vpack.c.b16 %v101, %v100
    %v105 = vpack.c.b16 %v103, %v102
    %vm108 = vcmask 261120
    %v110 = vsel %vm108, %v84, 0
    %112 = vmatprep.subr.bf16.mxu0 0
    %113 = vmatpush1.bf16.msra.mxu0 %v104
    %114 = vmatprep.subr.bf16.mxu0 0
    %115 = vmatpush1.bf16.msra.mxu0 %v105
    %116 = vmatprep.subr.bf16.mxu0 0
    %117 = vmatpush1.bf16.msra.mxu0 0
    %118 = vmatprep.subr.bf16.mxu0 0
    %119 = vmatpush1.bf16.msra.mxu0 0
    %120 = vmatprep.subr.bf16.mxu0 0
    %121 = vmatpush1.bf16.msra.mxu0 0
    %122 = vmatprep.subr.bf16.mxu0 0
    %123 = vmatpush1.bf16.msra.mxu0 0
    %124 = vmatprep.subr.bf16.mxu0 0
    %125 = vmatpush1.bf16.msra.mxu0 0
    %126 = vmatprep.subr.bf16.mxu0 0
    %127 = vmatpush1.bf16.msra.mxu0 0
    %128 = vmatprep.subr.bf16.mxu0 0
    %129 = vmatpush1.bf16.msra.mxu0 0
    %130 = vmatprep.subr.bf16.mxu0 0
    %131 = vmatpush1.bf16.msra.mxu0 0
    %132 = vmatprep.subr.bf16.mxu0 0
    %133 = vmatpush1.bf16.msra.mxu0 0
    %134 = vmatprep.subr.bf16.mxu0 0
    %135 = vmatpush1.bf16.msra.mxu0 0
    %136 = vmatprep.subr.bf16.mxu0 0
    %137 = vmatpush1.bf16.msra.mxu0 0
    %138 = vmatprep.subr.bf16.mxu0 0
    %139 = vmatpush1.bf16.msra.mxu0 0
    %140 = vmatprep.subr.bf16.mxu0 0
    %141 = vmatpush1.bf16.msra.mxu0 0
    %142 = vmatprep.subr.bf16.mxu0 0
    %143 = vmatpush1.bf16.msra.mxu0 0
    %144 = vmatprep.mubr.bf16.mxu0 0
    %145 = vmatmul.mubr.bf16.gmra.mrb[0].mxu0 %v110
    %v146 = vpop.f32.mrb[0].mxu0
    %v147 = vadd.f32 %v94, %v146
    %v148 = vpop.f32.mrb[0].mxu0
    %v149 = vpop.f32.mrb[0].mxu0
    %v150 = vpop.f32.mrb[0].mxu0
    %151 = vdwg.mxu0
    %v152 = vmax.f32 %v147, 0.0
    %v153 = vpack.c.bf16 %v152, %v152
    %v154 = vld [vmem:[#allocation7] sm:$0xf]
    %v155 = vld [vmem:[#allocation7 + $0x4] sm:$0xf]
    %v156 = vld [vmem:[#allocation7 + $0x8] sm:$0xf]
    %v157 = vld [vmem:[#allocation7 + $0xc] sm:$0xf]
    %v158 = vld [vmem:[#allocation7 + $0x10] sm:$0xf]
    %v159 = vld [vmem:[#allocation7 + $0x14] sm:$0xf]
    %v160 = vld [vmem:[#allocation7 + $0x18] sm:$0xf]
    %v161 = vld [vmem:[#allocation7 + $0x1c] sm:$0xf]
    %v162 = vld [vmem:[#allocation7 + $0x20] sm:$0xf]
    %v163 = vld [vmem:[#allocation7 + $0x24] sm:$0xf]
    %v164 = vld [vmem:[#allocation7 + $0x28] sm:$0xf]
    %v165 = vld [vmem:[#allocation7 + $0x2c] sm:$0xf]
    %v166 = vld [vmem:[#allocation7 + $0x30] sm:$0xf]
    %v167 = vld [vmem:[#allocation7 + $0x34] sm:$0xf]
    %v168 = vld [vmem:[#allocation7 + $0x38] sm:$0xf]
    %v169 = vld [vmem:[#allocation7 + $0x3c] sm:$0xf]
    %v170 = vld [vmem:[%s4] sm:$0x1]
    %v172 = vlaneseq
    %v173 = vshrl.u32 %v172, 7
    %v174 = vsub.s32 0, %v173
    %v175 = vrot.slane %v170, %v174
    %v193 = vunpack.c.l.b16 %v154
    %v194 = vunpack.c.l.b16 %v155
    %v195 = vunpack.c.l.b16 %v156
    %v196 = vunpack.c.l.b16 %v157
    %v197 = vunpack.c.l.b16 %v158
    %v198 = vunpack.c.l.b16 %v159
    %v199 = vunpack.c.l.b16 %v160
    %v200 = vunpack.c.l.b16 %v161
    %v201 = vunpack.c.l.b16 %v162
    %v202 = vunpack.c.l.b16 %v163
    %v203 = vunpack.c.l.b16 %v164
    %v204 = vunpack.c.l.b16 %v165
    %v205 = vunpack.c.l.b16 %v166
    %v206 = vunpack.c.l.b16 %v167
    %v207 = vunpack.c.l.b16 %v168
    %v208 = vunpack.c.l.b16 %v169
    %v209 = vpack.c.b16 %v194, %v193
    %v210 = vpack.c.b16 %v196, %v195
    %v211 = vpack.c.b16 %v198, %v197
    %v212 = vpack.c.b16 %v200, %v199
    %v213 = vpack.c.b16 %v202, %v201
    %v214 = vpack.c.b16 %v204, %v203
    %v215 = vpack.c.b16 %v206, %v205
    %v216 = vpack.c.b16 %v208, %v207
    %225 = vmatprep.subr.bf16.mxu0 0
    %226 = vmatpush1.bf16.msra.mxu0 %v209
    %227 = vmatprep.subr.bf16.mxu0 0
    %228 = vmatpush1.bf16.msra.mxu0 %v210
    %229 = vmatprep.subr.bf16.mxu0 0
    %230 = vmatpush1.bf16.msra.mxu0 %v211
    %231 = vmatprep.subr.bf16.mxu0 0
    %232 = vmatpush1.bf16.msra.mxu0 %v212
    %233 = vmatprep.subr.bf16.mxu0 0
    %234 = vmatpush1.bf16.msra.mxu0 %v213
    %235 = vmatprep.subr.bf16.mxu0 0
    %236 = vmatpush1.bf16.msra.mxu0 %v214
    %237 = vmatprep.subr.bf16.mxu0 0
    %238 = vmatpush1.bf16.msra.mxu0 %v215
    %239 = vmatprep.subr.bf16.mxu0 0
    %240 = vmatpush1.bf16.msra.mxu0 %v216
    %241 = vmatprep.subr.bf16.mxu0 0
    %242 = vmatpush1.bf16.msra.mxu0 0
    %243 = vmatprep.subr.bf16.mxu0 0
    %244 = vmatpush1.bf16.msra.mxu0 0
    %245 = vmatprep.subr.bf16.mxu0 0
    %246 = vmatpush1.bf16.msra.mxu0 0
    %247 = vmatprep.subr.bf16.mxu0 0
    %248 = vmatpush1.bf16.msra.mxu0 0
    %249 = vmatprep.subr.bf16.mxu0 0
    %250 = vmatpush1.bf16.msra.mxu0 0
    %251 = vmatprep.subr.bf16.mxu0 0
    %252 = vmatpush1.bf16.msra.mxu0 0
    %253 = vmatprep.subr.bf16.mxu0 0
    %254 = vmatpush1.bf16.msra.mxu0 0
    %255 = vmatprep.subr.bf16.mxu0 0
    %256 = vmatpush1.bf16.msra.mxu0 0
    %257 = vmatprep.mubr.bf16.mxu0 0
    %258 = vmatmul.mubr.bf16.gmra.mrb[0].mxu0 %v153
    %v259 = vpop.f32.mrb[0].mxu0
    %v260 = vadd.f32 %v175, %v259
    %v261 = vpop.f32.mrb[0].mxu0
    %v262 = vpop.f32.mrb[0].mxu0
    %v263 = vpop.f32.mrb[0].mxu0
    %264 = vdwg.mxu0
    %v265 = vmax.f32 %v260, 0.0
    %v266 = vpack.c.bf16 %v265, %v265
    %v267 = vld [vmem:[#allocation8] sm:$0xf]
    %v268 = vld [vmem:[#allocation8 + $0x4] sm:$0xf]
    %v269 = vld [vmem:[#allocation8 + $0x8] sm:$0xf]
    %v270 = vld [vmem:[#allocation8 + $0xc] sm:$0xf]
    %v271 = vld [vmem:[#allocation8 + $0x10] sm:$0xf]
    %v272 = vld [vmem:[#allocation8 + $0x14] sm:$0xf]
    %v273 = vld [vmem:[#allocation8 + $0x18] sm:$0xf]
    %v274 = vld [vmem:[#allocation8 + $0x1c] sm:$0xf]
    %v275 = vld [vmem:[#allocation8 + $0x20] sm:$0xf]
    %v276 = vld [vmem:[#allocation8 + $0x24] sm:$0xf]
    %v277 = vld [vmem:[#allocation8 + $0x28] sm:$0xf]
    %v278 = vld [vmem:[#allocation8 + $0x2c] sm:$0xf]
    %v279 = vld [vmem:[#allocation8 + $0x30] sm:$0xf]
    %v280 = vld [vmem:[#allocation8 + $0x34] sm:$0xf]
    %v281 = vld [vmem:[#allocation8 + $0x38] sm:$0xf]
    %v282 = vld [vmem:[#allocation8 + $0x3c] sm:$0xf]
    %v283 = vld [vmem:[%s6] sm:$0x1]
    %v285 = vlaneseq
    %v286 = vshrl.u32 %v285, 7
    %v287 = vsub.s32 0, %v286
    %v288 = vrot.slane %v283, %v287
    %v306 = vunpack.c.l.b16 %v267
    %v307 = vunpack.c.l.b16 %v268
    %v308 = vunpack.c.l.b16 %v269
    %v309 = vunpack.c.l.b16 %v270
    %v310 = vunpack.c.l.b16 %v271
    %v311 = vunpack.c.l.b16 %v272
    %v312 = vunpack.c.l.b16 %v273
    %v313 = vunpack.c.l.b16 %v274
    %v314 = vunpack.c.l.b16 %v275
    %v315 = vunpack.c.l.b16 %v276
    %v316 = vunpack.c.l.b16 %v277
    %v317 = vunpack.c.l.b16 %v278
    %v318 = vunpack.c.l.b16 %v279
    %v319 = vunpack.c.l.b16 %v280
    %v320 = vunpack.c.l.b16 %v281
    %v321 = vunpack.c.l.b16 %v282
    %v322 = vpack.c.b16 %v307, %v306
    %v323 = vpack.c.b16 %v309, %v308
    %v324 = vpack.c.b16 %v311, %v310
    %v325 = vpack.c.b16 %v313, %v312
    %v326 = vpack.c.b16 %v315, %v314
    %v327 = vpack.c.b16 %v317, %v316
    %v328 = vpack.c.b16 %v319, %v318
    %v329 = vpack.c.b16 %v321, %v320
    %338 = vmatprep.subr.bf16.mxu0 0
    %339 = vmatpush1.bf16.msra.mxu0 %v322
    %340 = vmatprep.subr.bf16.mxu0 0
    %341 = vmatpush1.bf16.msra.mxu0 %v323
    %342 = vmatprep.subr.bf16.mxu0 0
    %343 = vmatpush1.bf16.msra.mxu0 %v324
    %344 = vmatprep.subr.bf16.mxu0 0
    %345 = vmatpush1.bf16.msra.mxu0 %v325
    %346 = vmatprep.subr.bf16.mxu0 0
    %347 = vmatpush1.bf16.msra.mxu0 %v326
    %348 = vmatprep.subr.bf16.mxu0 0
    %349 = vmatpush1.bf16.msra.mxu0 %v327
    %350 = vmatprep.subr.bf16.mxu0 0
    %351 = vmatpush1.bf16.msra.mxu0 %v328
    %352 = vmatprep.subr.bf16.mxu0 0
    %353 = vmatpush1.bf16.msra.mxu0 %v329
    %354 = vmatprep.subr.bf16.mxu0 0
    %355 = vmatpush1.bf16.msra.mxu0 0
    %356 = vmatprep.subr.bf16.mxu0 0
    %357 = vmatpush1.bf16.msra.mxu0 0
    %358 = vmatprep.subr.bf16.mxu0 0
    %359 = vmatpush1.bf16.msra.mxu0 0
    %360 = vmatprep.subr.bf16.mxu0 0
    %361 = vmatpush1.bf16.msra.mxu0 0
    %362 = vmatprep.subr.bf16.mxu0 0
    %363 = vmatpush1.bf16.msra.mxu0 0
    %364 = vmatprep.subr.bf16.mxu0 0
    %365 = vmatpush1.bf16.msra.mxu0 0
    %366 = vmatprep.subr.bf16.mxu0 0
    %367 = vmatpush1.bf16.msra.mxu0 0
    %368 = vmatprep.subr.bf16.mxu0 0
    %369 = vmatpush1.bf16.msra.mxu0 0
    %370 = vmatprep.mubr.bf16.mxu0 0
    %371 = vmatmul.mubr.bf16.gmra.mrb[0].mxu0 %v266
    %v372 = vpop.f32.mrb[0].mxu0
    %v373 = vadd.f32 %v288, %v372
    %v374 = vpop.f32.mrb[0].mxu0
    %v375 = vpop.f32.mrb[0].mxu0
    %v376 = vpop.f32.mrb[0].mxu0
    %377 = vdwg.mxu0
    %vm378 = vcmask 130048
    %v379 = vsel %vm378, %v373, -inf
    %380 = vmax.xlane.f32.xlu0 %v379
    %v381 = vpop.xlane.xlu0 %380
    %v382 = vsub.f32 %v373, %v381
    %v383 = vmul.f32 %v382, 1.442695
    %v384 = vpow.pop %v383
    %v385 = vsel %vm378, %v384, 0.0
    %386 = vadd.xlane.f32.xlu0 %v385
    %v387 = vpop.xlane.xlu0 %386
    %v388 = vrcp.pop %v387
    %v389 = vmul.f32 %v384, %v388
    %390 = vst.msk [vmem:[#allocation10] sm:$0xff] %vm378, %v389
    %392 = vrot.lane.b32.xlu0 %v373, 112
    %v393 = vpop.permute.xlu0 %392
    %vm395 = vcmask 7168
    %396 = vst.msk [vmem:[%s8] sm:$0xff] %vm395, %v393
    // Predicated region
    $region46: #{tpu_custom_call.1} parent=1 // pred_check
      _
    $region47: #{tpu_custom_call.1} parent=1 // pred_check_branch
      %398 = sbr.rel (0) target = $region49
    $region48: #{tpu_custom_call.1} parent=1 // pred_region
      %s400 = ssub.s32 128, 128
      %401 = vsyncadd [#allocation4], %s400
      %s403 = sshll.u32 [#allocation10], 4
      %s404 = int_to_ptr.vmem [resolvable:$true] %s403
      %406 = dma.vmem_to_hbm [thread:$0]  %s404, 128, %s7, [#allocation4]
    $region49: #{tpu_custom_call.1} parent=1 // pred_fallthru
      _
    // Predicated region
    $region50: #{tpu_custom_call.1} parent=1 // pred_check
      _
    $region51: #{tpu_custom_call.1} parent=1 // pred_check_branch
      %408 = sbr.rel (0) target = $region53
    $region52: #{tpu_custom_call.1} parent=1 // pred_region
      _
    $region53: #{tpu_custom_call.1} parent=1 // pred_fallthru
      _
    // Predicated region
    $region54: #{tpu_custom_call.1} parent=1 // pred_check
      _
    $region55: #{tpu_custom_call.1} parent=1 // pred_check_branch
      %410 = sbr.rel (0) target = $region57
    $region56: #{tpu_custom_call.1} parent=1 // pred_region
      %411 = dma.done [#allocation4], 128
    $region57: #{tpu_custom_call.1} parent=1 // pred_fallthru
      _
    // Predicated region
    $region58: #{tpu_custom_call.1} parent=1 // pred_check
      _
    $region59: #{tpu_custom_call.1} parent=1 // pred_check_branch
      %413 = sbr.rel (0) target = $region61
    $region60: #{tpu_custom_call.1} parent=1 // pred_region
      _
    $region61: #{tpu_custom_call.1} parent=1 // pred_fallthru
      _
    %414 = vsyncpa [#allocation3], 1
    %415 = vsyncpa [#allocation6], 1
    %416 = vsyncpa [#allocation9], 1
    %417 = vsyncpa [#allocation4], 1

</llo_original>
